<compile_context>
chip_gen: v7x
topology: tpu7x:2x2x1
jax: 0.10.0
libtpu: 0.0.40
codegen_flags: <defaults>
</compile_context>

<pallas_src>
import functools

import jax
import jax.numpy as jnp
from jax import lax
from jax.experimental import pallas as pl
from jax.experimental.pallas import tpu as pltpu


def _circconv_kernel(x_ref, w_ref, o_ref, col_ref, *, k_taps, n_adj):
    # x_ref  : (Bt, C_in, N)     unpadded input block (Bt batches)
    # w_ref  : (C_out, KC_pad)   im2col weight, tap-major cols; col K*C_in = bias,
    #                            remaining cols are zero padding
    # o_ref  : (C_out, Bt*N)     lane-dense output slab for this batch block
    # col_ref: (KC_pad, Bt*N)    VMEM im2col scratch
    bt, c_in, n = x_ref.shape
    c_out, kc_pad = w_ref.shape
    kc_data = k_taps * c_in
    width = col_ref.shape[1]

    # Constant rows: ones row (folded bias) + zero pad rows.  Re-written every
    # grid step (a few short rows, trivial cost) so correctness never depends
    # on which TensorCore owns step 0 when the "parallel" grid is split.
    col_ref[kc_data:kc_data + 1, :] = jnp.ones((1, width), col_ref.dtype)
    if kc_pad > kc_data + 1:
        col_ref[kc_data + 1:, :] = jnp.zeros((kc_pad - kc_data - 1, width),
                                             col_ref.dtype)

    def fill(b, start):
        # Tap k of the conv needs x[:, (pos + k - n_adj) mod N], i.e.
        # roll(x, shift=(n_adj - k) mod N) -- an XLU lane rotate, in-register.
        xb = x_ref[b]                                    # (C_in, N)
        cols = []
        for k in range(k_taps):                          # K is small & static
            s = (n_adj - k) % n
            cols.append(xb if s == 0 else pltpu.roll(xb, shift=s, axis=1))
        xcol = jnp.concatenate(cols, axis=0)             # (K*C_in, N)
        col_ref[0:kc_data, pl.ds(start, n)] = xcol.astype(col_ref.dtype)

    # Scatter each batch's im2col slab into its lane range of the scratch.
    if bt <= 8 or (n % 128) != 0:
        # Small block (or non-128-aligned N): static lane offsets.
        for b in range(bt):
            fill(b, b * n)
    else:
        # Large block with 128-aligned lane offsets: rolled loop keeps trace
        # size and vreg pressure bounded.
        def body(b, carry):
            fill(b, pl.multiple_of(b * n, n))
            return carry
        lax.fori_loop(0, bt, body, 0, unroll=2)

    # One MXU matmul folds all K taps, all Bt batches and the bias:
    #   (C_out, KC_pad) x (KC_pad, Bt*N) -> (C_out, Bt*N), f32 accumulation.
    o_ref[...] = jnp.dot(w_ref[...], col_ref[...],
                         preferred_element_type=jnp.float32).astype(o_ref.dtype)


def circ_conv(x, weight, bias, n_adj, *, block_b=None, compute_dtype=None):
    """Circular Conv1d.  x: (B, C_in, N); weight: (C_out, C_in, K); bias: (C_out,)."""
    B, c_in, N = x.shape
    c_out, c_in_w, K = weight.shape
    assert c_in_w == c_in
    assert K == 2 * n_adj + 1
    # The single torch.cat wrap is a true circular conv only while the halo
    # does not exceed one full period.
    assert n_adj <= N, "n_adj must be <= sequence length N"

    kc_data = K * c_in
    kc_pad = ((kc_data + 1 + 7) // 8) * 8        # +1 bias row, pad to 8 sublanes

    # Tap-major im2col weight with folded bias:
    #   w2[o, k*C_in + i] = weight[o, i, k]; w2[o, kc_data] = bias[o]; rest 0.
    w2 = jnp.transpose(weight, (0, 2, 1)).reshape(c_out, kc_data)
    w2 = jnp.concatenate(
        [w2, bias.reshape(c_out, 1),
         jnp.zeros((c_out, kc_pad - kc_data - 1), w2.dtype)], axis=1)

    dtype = jnp.dtype(x.dtype if compute_dtype is None else compute_dtype)
    x_in = x.astype(dtype)
    w2 = w2.astype(dtype)
    out_dtype = x.dtype
    in_item = dtype.itemsize
    out_item = jnp.dtype(out_dtype).itemsize

    def step_bytes(bb):
        # Double-buffered input/output blocks + im2col scratch + weight.
        return (2 * bb * c_in * N * in_item
                + 2 * bb * c_out * N * out_item
                + kc_pad * bb * N * in_item
                + 2 * c_out * kc_pad * in_item)

    if block_b is None:
        budget = 12 * 1024 * 1024            # fits the 16 MiB v5e scoped default
        divisors = [d for d in range(B, 0, -1) if B % d == 0]
        want_steps = 4 if B >= 4 else (2 if B >= 2 else 1)
        block_b = B                           # fallback: single full-size block
        for min_steps in sorted({want_steps, min(2, B), 1}, reverse=True):
            cands = [d for d in divisors
                     if B // d >= min_steps and step_bytes(d) <= budget
                     and ((d * N) % 128 == 0 or d == B)]
            if cands:
                block_b = cands[0]            # biggest block meeting the budget
                break
        # TODO(synk): pad B to a nicer multiple for prime B with N % 128 != 0 so
        # v7x still gets >=2 parallel steps instead of a single-step grid.
    assert B % block_b == 0
    grid = (B // block_b,)

    cost = pl.CostEstimate(
        flops=2 * B * c_out * kc_data * N,
        transcendentals=0,
        bytes_accessed=(B * c_in * N * in_item + B * c_out * N * out_item
                        + c_out * kc_pad * in_item))

    out2 = pl.pallas_call(
        functools.partial(_circconv_kernel, k_taps=K, n_adj=n_adj),
        out_shape=jax.ShapeDtypeStruct((c_out, B * N), out_dtype),
        grid_spec=pltpu.PrefetchScalarGridSpec(
            num_scalar_prefetch=0,
            grid=grid,
            in_specs=[
                pl.BlockSpec((block_b, c_in, N), lambda i: (i, 0, 0)),
                pl.BlockSpec((c_out, kc_pad), lambda i: (0, 0)),
            ],
            out_specs=pl.BlockSpec((c_out, block_b * N), lambda i: (0, i)),
            scratch_shapes=[pltpu.VMEM((kc_pad, block_b * N), dtype)],
        ),
        compiler_params=pltpu.CompilerParams(
            dimension_semantics=("parallel",),
            vmem_limit_bytes=32 * 1024 * 1024,
        ),
        cost_estimate=cost,
    )(x_in, w2)

    # Back to the module's (B, C_out, N) layout.
    return jnp.transpose(out2.reshape(c_out, B, N), (1, 0, 2))


def _reference(x, weight, bias, n_adj):
    # Pure-JAX reference: circular pad + valid conv1d (mirrors the torch module).
    if n_adj != 0:
        x = jnp.concatenate([x[..., -n_adj:], x, x[..., :n_adj]], axis=2)
    out = lax.conv_general_dilated(
        x, weight, window_strides=(1,), padding="VALID",
        dimension_numbers=("NCH", "OIH", "NCH"))
    return out + bias.reshape(1, -1, 1)


if __name__ == "__main__":
    # Module config: CircConv(state_dim=4, out_state_dim=4, n_adj=4), contour len 8.
    B, state_dim, out_state_dim, n_adj, seq = 2, 4, 4, 4, 8
    K = 2 * n_adj + 1

    key = jax.random.PRNGKey(0)
    kx, kw, kb = jax.random.split(key, 3)
    x = jax.random.normal(kx, (B, state_dim, seq), dtype=jnp.float32)
    # Deterministic synthetic Conv1d parameters: weight (C_out, C_in, K), bias (C_out,)
    weight = 0.1 * jax.random.normal(kw, (out_state_dim, state_dim, K),
                                     dtype=jnp.float32)
    bias = 0.1 * jax.random.normal(kb, (out_state_dim,), dtype=jnp.float32)

    out = jax.block_until_ready(circ_conv(x, weight, bias, n_adj))

    ref = _reference(x, weight, bias, n_adj)
    assert out.shape == (B, out_state_dim, seq)
    assert jnp.allclose(out, ref, atol=1e-5, rtol=1e-5), "mismatch vs reference"
    print("KERNEL_OK")
</pallas_src>

<mosaic_0001>
module attributes {stable_mosaic.version = 11 : i64} {
  func.func @_circconv_kernel(%arg0: i32, %arg1: memref<2x4x8xf32, #tpu.memory_space<vmem>>, %arg2: memref<4x40xf32, #tpu.memory_space<vmem>>, %arg3: memref<4x16xf32, #tpu.memory_space<vmem>>, %arg4: memref<40x16xf32, #tpu.memory_space<vmem>>) attributes {dimension_semantics = [#tpu.dimension_semantics<parallel>], iteration_bounds = array<i64: 1>, scalar_prefetch = 0 : i64, scratch_operands = 1 : i64, tpu.core_type = #tpu.core_type<tc>, window_params = [{transform_indices = @transform_0, window_bounds = array<i64: 2, 4, 8>}, {pipeline_mode = #tpu.pipeline_mode<synchronous>, transform_indices = @transform_1, window_bounds = array<i64: 4, 40>}, {transform_indices = @transform_2, window_bounds = array<i64: 4, 16>}]} {
    %cst = arith.constant 1.000000e+00 : f32
    %0 = vector.broadcast %cst : f32 to vector<1x16xf32>
    %c36 = arith.constant 36 : index
    %c0 = arith.constant 0 : index
    %1 = vector.load %arg4[%c36, %c0] : memref<40x16xf32, #tpu.memory_space<vmem>>, vector<1x16xf32>
    tpu.vector_store %arg4[%c36, %c0], %0 {strides = array<i32>} : memref<40x16xf32, #tpu.memory_space<vmem>>, vector<1x16xf32>,
    %cst_0 = arith.constant 0.000000e+00 : f32
    %2 = vector.broadcast %cst_0 : f32 to vector<3x16xf32>
    %c37 = arith.constant 37 : index
    %c0_1 = arith.constant 0 : index
    %3 = vector.load %arg4[%c37, %c0_1] : memref<40x16xf32, #tpu.memory_space<vmem>>, vector<3x16xf32>
    tpu.vector_store %arg4[%c37, %c0_1], %2 {strides = array<i32>} : memref<40x16xf32, #tpu.memory_space<vmem>>, vector<3x16xf32>,
    %c0_2 = arith.constant 0 : index
    %c0_3 = arith.constant 0 : index
    %c0_4 = arith.constant 0 : index
    %4 = vector.load %arg1[%c0_2, %c0_3, %c0_4] : memref<2x4x8xf32, #tpu.memory_space<vmem>>, vector<1x4x8xf32>
    %5 = vector.shape_cast %4 : vector<1x4x8xf32> to vector<4x8xf32>
    %c4_i32 = arith.constant 4 : i32
    %6 = tpu.dynamic_rotate %5 by %c4_i32 dim 1 : vector<4x8xf32>, i32 -> vector<4x8xf32>
    %c3_i32 = arith.constant 3 : i32
    %7 = tpu.dynamic_rotate %5 by %c3_i32 dim 1 : vector<4x8xf32>, i32 -> vector<4x8xf32>
    %c2_i32 = arith.constant 2 : i32
    %8 = tpu.dynamic_rotate %5 by %c2_i32 dim 1 : vector<4x8xf32>, i32 -> vector<4x8xf32>
    %c1_i32 = arith.constant 1 : i32
    %9 = tpu.dynamic_rotate %5 by %c1_i32 dim 1 : vector<4x8xf32>, i32 -> vector<4x8xf32>
    %c7_i32 = arith.constant 7 : i32
    %10 = tpu.dynamic_rotate %5 by %c7_i32 dim 1 : vector<4x8xf32>, i32 -> vector<4x8xf32>
    %c6_i32 = arith.constant 6 : i32
    %11 = tpu.dynamic_rotate %5 by %c6_i32 dim 1 : vector<4x8xf32>, i32 -> vector<4x8xf32>
    %c5_i32 = arith.constant 5 : i32
    %12 = tpu.dynamic_rotate %5 by %c5_i32 dim 1 : vector<4x8xf32>, i32 -> vector<4x8xf32>
    %c4_i32_5 = arith.constant 4 : i32
    %13 = tpu.dynamic_rotate %5 by %c4_i32_5 dim 1 : vector<4x8xf32>, i32 -> vector<4x8xf32>
    %14 = tpu.concatenate %6, %7, %8, %9, %5, %10, %11, %12, %13 in 0 : vector<4x8xf32>, vector<4x8xf32>, vector<4x8xf32>, vector<4x8xf32>, vector<4x8xf32>, vector<4x8xf32>, vector<4x8xf32>, vector<4x8xf32>, vector<4x8xf32> -> vector<36x8xf32>
    %c0_6 = arith.constant 0 : index
    %c0_7 = arith.constant 0 : index
    %15 = vector.load %arg4[%c0_6, %c0_7] : memref<40x16xf32, #tpu.memory_space<vmem>>, vector<36x8xf32>
    tpu.vector_store %arg4[%c0_6, %c0_7], %14 {strides = array<i32>} : memref<40x16xf32, #tpu.memory_space<vmem>>, vector<36x8xf32>,
    %c1 = arith.constant 1 : index
    %c0_8 = arith.constant 0 : index
    %c0_9 = arith.constant 0 : index
    %16 = vector.load %arg1[%c1, %c0_8, %c0_9] : memref<2x4x8xf32, #tpu.memory_space<vmem>>, vector<1x4x8xf32>
    %17 = vector.shape_cast %16 : vector<1x4x8xf32> to vector<4x8xf32>
    %c4_i32_10 = arith.constant 4 : i32
    %18 = tpu.dynamic_rotate %17 by %c4_i32_10 dim 1 : vector<4x8xf32>, i32 -> vector<4x8xf32>
    %c3_i32_11 = arith.constant 3 : i32
    %19 = tpu.dynamic_rotate %17 by %c3_i32_11 dim 1 : vector<4x8xf32>, i32 -> vector<4x8xf32>
    %c2_i32_12 = arith.constant 2 : i32
    %20 = tpu.dynamic_rotate %17 by %c2_i32_12 dim 1 : vector<4x8xf32>, i32 -> vector<4x8xf32>
    %c1_i32_13 = arith.constant 1 : i32
    %21 = tpu.dynamic_rotate %17 by %c1_i32_13 dim 1 : vector<4x8xf32>, i32 -> vector<4x8xf32>
    %c7_i32_14 = arith.constant 7 : i32
    %22 = tpu.dynamic_rotate %17 by %c7_i32_14 dim 1 : vector<4x8xf32>, i32 -> vector<4x8xf32>
    %c6_i32_15 = arith.constant 6 : i32
    %23 = tpu.dynamic_rotate %17 by %c6_i32_15 dim 1 : vector<4x8xf32>, i32 -> vector<4x8xf32>
    %c5_i32_16 = arith.constant 5 : i32
    %24 = tpu.dynamic_rotate %17 by %c5_i32_16 dim 1 : vector<4x8xf32>, i32 -> vector<4x8xf32>
    %c4_i32_17 = arith.constant 4 : i32
    %25 = tpu.dynamic_rotate %17 by %c4_i32_17 dim 1 : vector<4x8xf32>, i32 -> vector<4x8xf32>
    %26 = tpu.concatenate %18, %19, %20, %21, %17, %22, %23, %24, %25 in 0 : vector<4x8xf32>, vector<4x8xf32>, vector<4x8xf32>, vector<4x8xf32>, vector<4x8xf32>, vector<4x8xf32>, vector<4x8xf32>, vector<4x8xf32>, vector<4x8xf32> -> vector<36x8xf32>
    %c0_18 = arith.constant 0 : index
    %c8 = arith.constant 8 : index
    %27 = vector.load %arg4[%c0_18, %c8] : memref<40x16xf32, #tpu.memory_space<vmem>>, vector<36x8xf32>
    tpu.vector_store %arg4[%c0_18, %c8], %26 {strides = array<i32>} : memref<40x16xf32, #tpu.memory_space<vmem>>, vector<36x8xf32>,
    %c0_19 = arith.constant 0 : index
    %c0_20 = arith.constant 0 : index
    %28 = vector.load %arg2[%c0_19, %c0_20] : memref<4x40xf32, #tpu.memory_space<vmem>>, vector<4x40xf32>
    %c0_21 = arith.constant 0 : index
    %c0_22 = arith.constant 0 : index
    %29 = vector.load %arg4[%c0_21, %c0_22] : memref<40x16xf32, #tpu.memory_space<vmem>>, vector<40x16xf32>
    %cst_23 = arith.constant dense<0.000000e+00> : vector<4x16xf32>
    %30 = tpu.matmul %28, %29, %cst_23 {dimension_numbers = #tpu.dot_dimension_numbers<[1], [0], [0], [1], [0, 0, 1, 1], [], []>} : vector<4x40xf32>, vector<40x16xf32>, vector<4x16xf32> -> vector<4x16xf32>
    %c0_24 = arith.constant 0 : index
    %c0_25 = arith.constant 0 : index
    %31 = vector.load %arg3[%c0_24, %c0_25] : memref<4x16xf32, #tpu.memory_space<vmem>>, vector<4x16xf32>
    tpu.vector_store %arg3[%c0_24, %c0_25], %30 {strides = array<i32>} : memref<4x16xf32, #tpu.memory_space<vmem>>, vector<4x16xf32>,
    return
  }
  func.func @transform_0(%arg0: i32) -> (i32, i32, i32) {
    %c0_i32 = arith.constant 0 : i32
    %c0_i32_0 = arith.constant 0 : i32
    %c0_i32_1 = arith.constant 0 : i32
    return %arg0, %c0_i32, %c0_i32_0 : i32, i32, i32
  }
  func.func @transform_1(%arg0: i32) -> (i32, i32) {
    %c0_i32 = arith.constant 0 : i32
    %c0_i32_0 = arith.constant 0 : i32
    %c0_i32_1 = arith.constant 0 : i32
    return %c0_i32, %c0_i32_0 : i32, i32
  }
  func.func @transform_2(%arg0: i32) -> (i32, i32) {
    %c0_i32 = arith.constant 0 : i32
    %c0_i32_0 = arith.constant 0 : i32
    return %c0_i32, %arg0 : i32, i32
  }
}

</mosaic_0001>

<llo_original>
// kernel: tpu_custom_call.1
$region0: #{tpu_custom_call.1}
  #allocation0 [shape = 'u32[]', space=smem, size = 0x4, offset = 0x4, fixed_abs, tag = 'smem constant byte address 0x4 - core index']
  #allocation1 [shape = 'u32[144,128]{1,0:T(1,128)}', space=vmem, size = 0x12000, scoped, tag = 'internal scratch']
  #allocation2 [shape = 'f32[40,16]{1,0:T(8,128)}', space=vmem, size = 0x5000, scoped, tag = 'scratch operand']
  %s0 = inlined_call_operand.hbm [shape: f32[2,4,8], index: 0, kind: input, shape index: {}]
  %s1 = inlined_call_operand.hbm [shape: f32[4,40], index: 1, kind: input, shape index: {}]
  %s2 = inlined_call_operand.hbm [shape: f32[4,16], index: 2, kind: output, shape index: {}]
  %s3 = sld [smem:[#allocation0]]
  $region26: #{tpu_custom_call.1} parent=0
    _
  %s5 = ssub.s32 1, %s3
  %s6 = scalar_select 0, %s5, %s3
  $region1: #{tpu_custom_call.1} parent=0
    #allocation3 [shape = 'u8[4096]{0}', space=vmem, size = 0x1000, scoped, tag = 'input window, operand 0, single buffered']
    #allocation4 [shape = 's32[1]{0}', space=sflag, size = 0x4, scoped, tag = 'scoped memory for tpu_custom_call.1']
    #allocation5 [shape = 's32[1]{0}', space=sflag, size = 0x4, scoped, tag = 'scoped memory for tpu_custom_call.1']
    #allocation6 [shape = 'u8[2048]{0}', space=vmem, size = 0x800, scoped, tag = 'input window, operand 1, single buffered']
    #allocation7 [shape = 's32[1]{0}', space=sflag, size = 0x4, scoped, tag = 'scoped memory for tpu_custom_call.1']
    #allocation8 [shape = 'u8[2048]{0}', space=vmem, size = 0x800, scoped, tag = 'output window, operand 0, single buffered']
    %7 = vsyncpa [#allocation4], 0
    %8 = vsyncpa [#allocation7], 0
    %9 = vsyncpa [#allocation5], 0
    // Predicated region
    $region2: #{tpu_custom_call.1} parent=1 // pred_check
      _
    $region3: #{tpu_custom_call.1} parent=1 // pred_check_branch
      %11 = sbr.rel (0) target = $region5
    $region4: #{tpu_custom_call.1} parent=1 // pred_region
      %s13 = ssub.s32 128, 128
      %14 = vsyncadd [#allocation4], %s13
      %s15 = sshll.u32 [#allocation3], 4
      %s16 = int_to_ptr.vmem [resolvable:$true] %s15
      %21 = dma.hbm_to_vmem [thread:$0]  %s0, 128, %s16, [#allocation4], 64, 64, 4
    $region5: #{tpu_custom_call.1} parent=1 // pred_fallthru
      _
    // Predicated region
    $region6: #{tpu_custom_call.1} parent=1 // pred_check
      _
    $region7: #{tpu_custom_call.1} parent=1 // pred_check_branch
      %23 = sbr.rel (0) target = $region9
    $region8: #{tpu_custom_call.1} parent=1 // pred_region
      %s25 = ssub.s32 64, 64
      %26 = vsyncadd [#allocation7], %s25
      %s28 = sshll.u32 [#allocation6], 4
      %s29 = int_to_ptr.vmem [resolvable:$true] %s28
      %31 = dma.hbm_to_vmem [thread:$0]  %s1, 64, %s29, [#allocation7]
    $region9: #{tpu_custom_call.1} parent=1 // pred_fallthru
      _
    // Predicated region
    $region10: #{tpu_custom_call.1} parent=1 // pred_check
      _
    $region11: #{tpu_custom_call.1} parent=1 // pred_check_branch
      %33 = sbr.rel (0) target = $region13
    $region12: #{tpu_custom_call.1} parent=1 // pred_region
      %34 = dma.done [#allocation4], 128
    $region13: #{tpu_custom_call.1} parent=1 // pred_fallthru
      _
    // Predicated region
    $region14: #{tpu_custom_call.1} parent=1 // pred_check
      _
    $region15: #{tpu_custom_call.1} parent=1 // pred_check_branch
      %36 = sbr.rel (0) target = $region17
    $region16: #{tpu_custom_call.1} parent=1 // pred_region
      %37 = dma.done [#allocation7], 64
    $region17: #{tpu_custom_call.1} parent=1 // pred_fallthru
      _
    %vm38 = vcmask 122880
    %39 = vst.msk [vmem:[#allocation2 + $0x24] sm:$0x1] %vm38, 1.0
    %vm40 = vcmask 124928
    %41 = vst.msk [vmem:[#allocation2 + $0x25] sm:$0x7] %vm40, 0.0
    %v42 = vld [vmem:[#allocation3] sm:$0xf]
    %vm43 = vcmask 1047616
    %44 = vrot.lane.b32.xlu0 %v42, 8
    %v45 = vpop.permute.xlu0 %44
    %v46 = vsel %vm43, %v45, %v42
    %47 = vrot.lane.b32.xlu0 %v46, 8
    %v48 = vpop.permute.xlu0 %47
    %v49 = vsel %vm43, %v48, %v42
    %v51 = vrot.slane %v49, 4
    %52 = vrot.lane.b32.xlu0 %v51, 127
    %v53 = vpop.permute.xlu0 %52
    %55 = vrot.lane.b32.xlu0 %v49, 126
    %v56 = vpop.permute.xlu0 %55
    %58 = vrot.lane.b32.xlu0 %v51, 125
    %v59 = vpop.permute.xlu0 %58
    %62 = vrot.lane.b32.xlu0 %v42, 4
    %v63 = vpop.permute.xlu0 %62
    %65 = vrot.lane.b32.xlu0 %v51, 3
    %v66 = vpop.permute.xlu0 %65
    %68 = vrot.lane.b32.xlu0 %v49, 2
    %v69 = vpop.permute.xlu0 %68
    %71 = vrot.lane.b32.xlu0 %v51, 1
    %v72 = vpop.permute.xlu0 %71
    %vm74 = vcmask 1043456
    %v75 = vsel %vm74, %v49, %v53
    %v76 = vsel %vm74, %v56, %v59
    %v77 = vsel %vm74, %v63, %v66
    %v78 = vsel %vm74, %v69, %v72
    %83 = vrot.lane.b32.xlu0 %v75, 124
    %v84 = vpop.permute.xlu0 %83
    %85 = vrot.lane.b32.xlu0 %v76, 124
    %v86 = vpop.permute.xlu0 %85
    %87 = vrot.lane.b32.xlu0 %v77, 124
    %v88 = vpop.permute.xlu0 %87
    %89 = vrot.lane.b32.xlu0 %v78, 124
    %v90 = vpop.permute.xlu0 %89
    %91 = vrot.lane.b32.xlu0 %v49, 124
    %v92 = vpop.permute.xlu0 %91
    %vm98 = vcmask 64512
    %99 = vst.msk [vmem:[#allocation2] sm:$0xff] %vm98, %v84
    %100 = vst.msk [vmem:[#allocation2 + $0x8] sm:$0xff] %vm98, %v86
    %101 = vst.msk [vmem:[#allocation2 + $0x10] sm:$0xff] %vm98, %v88
    %102 = vst.msk [vmem:[#allocation2 + $0x18] sm:$0xff] %vm98, %v90
    %vm103 = vcmask 60416
    %104 = vst.msk [vmem:[#allocation2 + $0x20] sm:$0xf] %vm103, %v92
    %s105 = scalar_lea.vmem [#allocation3], 4
    %v106 = vld [vmem:[%s105] sm:$0xf]
    %107 = vrot.lane.b32.xlu0 %v106, 8
    %v108 = vpop.permute.xlu0 %107
    %v109 = vsel %vm43, %v108, %v106
    %110 = vrot.lane.b32.xlu0 %v109, 8
    %v111 = vpop.permute.xlu0 %110
    %v112 = vsel %vm43, %v111, %v106
    %v114 = vrot.slane %v112, 4
    %115 = vrot.lane.b32.xlu0 %v114, 127
    %v116 = vpop.permute.xlu0 %115
    %118 = vrot.lane.b32.xlu0 %v112, 126
    %v119 = vpop.permute.xlu0 %118
    %121 = vrot.lane.b32.xlu0 %v114, 125
    %v122 = vpop.permute.xlu0 %121
    %125 = vrot.lane.b32.xlu0 %v106, 4
    %v126 = vpop.permute.xlu0 %125
    %128 = vrot.lane.b32.xlu0 %v114, 3
    %v129 = vpop.permute.xlu0 %128
    %131 = vrot.lane.b32.xlu0 %v112, 2
    %v132 = vpop.permute.xlu0 %131
    %134 = vrot.lane.b32.xlu0 %v114, 1
    %v135 = vpop.permute.xlu0 %134
    %v137 = vsel %vm74, %v112, %v116
    %v138 = vsel %vm74, %v119, %v122
    %v139 = vsel %vm74, %v126, %v129
    %v140 = vsel %vm74, %v132, %v135
    %145 = vrot.lane.b32.xlu0 %v137, 4
    %v146 = vpop.permute.xlu0 %145
    %147 = vrot.lane.b32.xlu0 %v138, 4
    %v148 = vpop.permute.xlu0 %147
    %149 = vrot.lane.b32.xlu0 %v139, 4
    %v150 = vpop.permute.xlu0 %149
    %151 = vrot.lane.b32.xlu0 %v140, 4
    %v152 = vpop.permute.xlu0 %151
    %153 = vrot.lane.b32.xlu0 %v112, 4
    %v154 = vpop.permute.xlu0 %153
    %vm160 = vcmask 130112
    %161 = vst.msk [vmem:[#allocation2] sm:$0xff] %vm160, %v146
    %162 = vst.msk [vmem:[#allocation2 + $0x8] sm:$0xff] %vm160, %v148
    %163 = vst.msk [vmem:[#allocation2 + $0x10] sm:$0xff] %vm160, %v150
    %164 = vst.msk [vmem:[#allocation2 + $0x18] sm:$0xff] %vm160, %v152
    %vm165 = vcmask 126016
    %166 = vst.msk [vmem:[#allocation2 + $0x20] sm:$0xf] %vm165, %v154
    %v167 = vld [vmem:[#allocation6] sm:$0xf]
    %v168 = vld [vmem:[#allocation2] sm:$0xff]
    %v169 = vld [vmem:[#allocation2 + $0x8] sm:$0xff]
    %v170 = vld [vmem:[#allocation2 + $0x10] sm:$0xff]
    %v171 = vld [vmem:[#allocation2 + $0x18] sm:$0xff]
    %v172 = vld [vmem:[#allocation2 + $0x20] sm:$0xff]
    %vm173 = vcmask 326656
    %v175 = vsel %vm173, %v167, 0
    %177 = vmatprep.subr.mxu0 0.0
    %178 = vmatpush1.msra.mxu0 %v168
    %179 = vmatprep.subr.mxu0 0.0
    %180 = vmatpush1.msra.mxu0 %v169
    %181 = vmatprep.subr.mxu0 0.0
    %182 = vmatpush1.msra.mxu0 %v170
    %183 = vmatprep.subr.mxu0 0.0
    %184 = vmatpush1.msra.mxu0 %v171
    %185 = vmatprep.subr.mxu0 0.0
    %186 = vmatpush1.msra.mxu0 %v172
    %187 = vmatprep.subr.mxu0 0.0
    %188 = vmatpush1.msra.mxu0 0.0
    %189 = vmatprep.subr.mxu0 0.0
    %190 = vmatpush1.msra.mxu0 0.0
    %191 = vmatprep.subr.mxu0 0.0
    %192 = vmatpush1.msra.mxu0 0.0
    %193 = vmatprep.subr.mxu0 0.0
    %194 = vmatpush1.msra.mxu0 0.0
    %195 = vmatprep.subr.mxu0 0.0
    %196 = vmatpush1.msra.mxu0 0.0
    %197 = vmatprep.subr.mxu0 0.0
    %198 = vmatpush1.msra.mxu0 0.0
    %199 = vmatprep.subr.mxu0 0.0
    %200 = vmatpush1.msra.mxu0 0.0
    %201 = vmatprep.subr.mxu0 0.0
    %202 = vmatpush1.msra.mxu0 0.0
    %203 = vmatprep.subr.mxu0 0.0
    %204 = vmatpush1.msra.mxu0 0.0
    %205 = vmatprep.subr.mxu0 0.0
    %206 = vmatpush1.msra.mxu0 0.0
    %207 = vmatprep.subr.mxu0 0.0
    %208 = vmatpush1.msra.mxu0 0.0
    %209 = vmatprep.subr.mxu0 0.0
    %210 = vmatpush1.msra.mxu0 0.0
    %211 = vmatprep.subr.mxu0 0.0
    %212 = vmatpush1.msra.mxu0 0.0
    %213 = vmatprep.subr.mxu0 0.0
    %214 = vmatpush1.msra.mxu0 0.0
    %215 = vmatprep.subr.mxu0 0.0
    %216 = vmatpush1.msra.mxu0 0.0
    %217 = vmatprep.subr.mxu0 0.0
    %218 = vmatpush1.msra.mxu0 0.0
    %219 = vmatprep.subr.mxu0 0.0
    %220 = vmatpush1.msra.mxu0 0.0
    %221 = vmatprep.subr.mxu0 0.0
    %222 = vmatpush1.msra.mxu0 0.0
    %223 = vmatprep.subr.mxu0 0.0
    %224 = vmatpush1.msra.mxu0 0.0
    %225 = vmatprep.subr.mxu0 0.0
    %226 = vmatpush1.msra.mxu0 0.0
    %227 = vmatprep.subr.mxu0 0.0
    %228 = vmatpush1.msra.mxu0 0.0
    %229 = vmatprep.subr.mxu0 0.0
    %230 = vmatpush1.msra.mxu0 0.0
    %231 = vmatprep.subr.mxu0 0.0
    %232 = vmatpush1.msra.mxu0 0.0
    %233 = vmatprep.subr.mxu0 0.0
    %234 = vmatpush1.msra.mxu0 0.0
    %235 = vmatprep.subr.mxu0 0.0
    %236 = vmatpush1.msra.mxu0 0.0
    %237 = vmatprep.subr.mxu0 0.0
    %238 = vmatpush1.msra.mxu0 0.0
    %239 = vmatprep.subr.mxu0 0.0
    %240 = vmatpush1.msra.mxu0 0.0
    %241 = vmatprep.mubr.f32.mxu0 0.0
    %242 = vmatmul.mubr.f32.gmra.mrb[0].mxu0 %v175
    %v243 = vpop.f32.mrb[0].mxu0
    %v244 = vadd.f32 0.0, %v243
    %v245 = vpop.f32.mrb[0].mxu0
    %246 = vdwg.mxu0
    %vm247 = vcmask 125952
    %248 = vst.msk [vmem:[#allocation8] sm:$0xf] %vm247, %v244
    // Predicated region
    $region18: #{tpu_custom_call.1} parent=1 // pred_check
      _
    $region19: #{tpu_custom_call.1} parent=1 // pred_check_branch
      %250 = sbr.rel (0) target = $region21
    $region20: #{tpu_custom_call.1} parent=1 // pred_region
      %s252 = ssub.s32 64, 64
      %253 = vsyncadd [#allocation5], %s252
      %s255 = sshll.u32 [#allocation8], 4
      %s256 = int_to_ptr.vmem [resolvable:$true] %s255
      %258 = dma.vmem_to_hbm [thread:$0]  %s256, 64, %s2, [#allocation5]
    $region21: #{tpu_custom_call.1} parent=1 // pred_fallthru
      _
    // Predicated region
    $region22: #{tpu_custom_call.1} parent=1 // pred_check
      _
    $region23: #{tpu_custom_call.1} parent=1 // pred_check_branch
      %260 = sbr.rel (0) target = $region25
    $region24: #{tpu_custom_call.1} parent=1 // pred_region
      %261 = dma.done [#allocation5], 64
    $region25: #{tpu_custom_call.1} parent=1 // pred_fallthru
      _
    %262 = vsyncpa [#allocation4], 1
    %263 = vsyncpa [#allocation7], 1
    %264 = vsyncpa [#allocation5], 1

</llo_original>
